<compile_context>
chip_gen: v5e
topology: v5e:2x2
jax: 0.10.0
libtpu: 0.0.40
codegen_flags: <defaults>
</compile_context>

<pallas_src>
import jax
import jax.numpy as jnp
from jax.experimental import pallas as pl
from jax.experimental.pallas import tpu as pltpu

LANE = 128


def _round_up(v, m):
    return ((v + m - 1) // m) * m


# ----------------------------------------------------------------------------- kernel
def cvae_kernel(xc_ref, c_ref, eps_ref,
                w_e1_ref, b_e1_ref,
                w_head_ref, b_head_ref,
                w_d1z_ref, w_d1c_ref, b_d1_ref,
                w_dm_ref, b_dm_ref,
                muvar_ref, loc_ref):
    f32 = jnp.float32
    mxu_dtype = w_e1_ref.dtype          # bf16 weights; accumulate in f32

    xc = xc_ref[...]                    # (TB, input_dim + c_dim)  f32
    c = c_ref[...]                      # (TB, c_dim)              f32
    eps = eps_ref[...]                  # (TB, Lp)                 f32 (zero-padded lanes)
    Lp = eps.shape[-1]

    # ---- Encoder first layer (non_linear=False -> no ReLU); x|c pre-concatenated ----
    h1 = jnp.dot(xc.astype(mxu_dtype), w_e1_ref[...],
                 preferred_element_type=f32) + b_e1_ref[...]

    # ---- Decoder conditioning projection: independent of the z chain, overlaps encoder ----
    dec_c = jnp.dot(c.astype(mxu_dtype), w_d1c_ref[...],
                    preferred_element_type=f32) + b_d1_ref[...]

    # ---- Fused mean/logvar head: single matmul; lanes [0:Lp)=mu, [Lp:2Lp)=logvar ----
    head = jnp.dot(h1.astype(mxu_dtype), w_head_ref[...],
                   preferred_element_type=f32) + b_head_ref[...]
    mu = head[:, :Lp]                   # 128-lane aligned slices -> no lane shuffles
    logvar = head[:, Lp:]

    # ---- Reparameterise (f32 elementwise; padded lanes stay exactly zero) ----
    z = mu + eps * jnp.exp(0.5 * logvar)

    # ---- Decoder ----
    h2 = jnp.dot(z.astype(mxu_dtype), w_d1z_ref[...],
                 preferred_element_type=f32) + dec_c
    loc = jnp.dot(h2.astype(mxu_dtype), w_dm_ref[...],
                  preferred_element_type=f32) + b_dm_ref[...]

    # Lane-dense stores (widths are multiples of 128).
    muvar_ref[...] = head               # packed [mu | logvar] slab
    loc_ref[...] = loc


# ----------------------------------------------------------------------------- params
def make_cvae_params(key, input_dim, hidden, latent_dim, c_dim, init_logvar=-3.0):
    """Raw f32 params matching the torch module (weights pre-transposed to [in, out])."""
    ks = jax.random.split(key, 5)

    def lin(k, din, dout):
        kw, kb = jax.random.split(k)
        w = jax.random.normal(kw, (din, dout), jnp.float32) * (1.0 / jnp.sqrt(din))
        b = jax.random.normal(kb, (1, dout), jnp.float32) * 0.01
        return w, b

    w_e1, b_e1 = lin(ks[0], input_dim + c_dim, hidden)      # Encoder: (x|c) -> hidden
    w_mu, b_mu = lin(ks[1], hidden, latent_dim)             # mean head
    w_lv, b_lv = lin(ks[2], hidden, latent_dim)             # logvar head
    w_d1, b_d1 = lin(ks[3], latent_dim + c_dim, hidden)     # Decoder: (z|c) -> hidden
    w_dm, b_dm = lin(ks[4], hidden, input_dim)              # decoder mean layer
    logvar_out = jnp.full((1, input_dim), init_logvar, jnp.float32)

    return dict(w_e1=w_e1, b_e1=b_e1, w_mu=w_mu, b_mu=b_mu, w_lv=w_lv, b_lv=b_lv,
                w_d1=w_d1, b_d1=b_d1, w_dm=w_dm, b_dm=b_dm, logvar_out=logvar_out,
                dims=dict(input_dim=input_dim, hidden=hidden,
                          latent_dim=latent_dim, c_dim=c_dim))


def pack_cvae_params(params, mxu_dtype=jnp.bfloat16):
    """Pad lane dims to multiples of 128, fuse mu/logvar heads, cast weights for the MXU."""
    d = params["dims"]
    input_dim, hidden = d["input_dim"], d["hidden"]
    latent, c_dim = d["latent_dim"], d["c_dim"]
    Hp = _round_up(hidden, LANE)
    Lp = _round_up(latent, LANE)
    Dp = _round_up(input_dim, LANE)

    def pad(a, rows, cols):
        return jnp.pad(a, ((0, rows - a.shape[0]), (0, cols - a.shape[1])))

    w_e1 = pad(params["w_e1"], input_dim + c_dim, Hp).astype(mxu_dtype)
    b_e1 = pad(params["b_e1"], 1, Hp)

    # Fused head weight: (Hp, 2*Lp); mu in cols [0:Lp), logvar in [Lp:2Lp).
    w_head = jnp.zeros((Hp, 2 * Lp), jnp.float32)
    w_head = w_head.at[:hidden, :latent].set(params["w_mu"])
    w_head = w_head.at[:hidden, Lp:Lp + latent].set(params["w_lv"])
    b_head = jnp.zeros((1, 2 * Lp), jnp.float32)
    b_head = b_head.at[:, :latent].set(params["b_mu"])
    b_head = b_head.at[:, Lp:Lp + latent].set(params["b_lv"])

    # Decoder first layer: split (z | c) weight rows.
    w_d1z = pad(params["w_d1"][:latent], Lp, Hp).astype(mxu_dtype)
    w_d1c = pad(params["w_d1"][latent:], c_dim, Hp).astype(mxu_dtype)
    b_d1 = pad(params["b_d1"], 1, Hp)

    w_dm = pad(params["w_dm"], Hp, Dp).astype(mxu_dtype)
    b_dm = pad(params["b_dm"], 1, Dp)

    return dict(w_e1=w_e1, b_e1=b_e1, w_head=w_head.astype(mxu_dtype), b_head=b_head,
                w_d1z=w_d1z, w_d1c=w_d1c, b_d1=b_d1, w_dm=w_dm, b_dm=b_dm,
                Hp=Hp, Lp=Lp, Dp=Dp, dims=d)


# ----------------------------------------------------------------------------- wrapper
def cvae_forward(x, c, eps, params, packed=None, batch_tile=256):
    """cVAE forward in one Pallas call.

    Returns: x_recon_loc [B, D], x_recon_scale [1, D] (broadcasts over batch, like torch
    Normal's scale parameter), mu [B, L], logvar [B, L].
    """
    if packed is None:
        packed = pack_cvae_params(params)
    d = packed["dims"]
    input_dim, latent, c_dim = d["input_dim"], d["latent_dim"], d["c_dim"]
    Hp, Lp, Dp = packed["Hp"], packed["Lp"], packed["Dp"]

    B = x.shape[0]
    c = c.astype(jnp.float32).reshape(B, c_dim)
    xc = jnp.concatenate([x.astype(jnp.float32), c], axis=1)      # host concat (XLA fuses)
    eps_p = jnp.pad(eps.astype(jnp.float32), ((0, 0), (0, Lp - latent)))

    # Batch tiling: weights stay resident in VMEM; activations stream per tile.
    # batch_tile=256 double-buffers in well under v7x's 64 MiB per-TC VMEM.
    TB = min(batch_tile, _round_up(B, 8))
    Bp = _round_up(B, TB)
    if Bp != B:
        xc = jnp.pad(xc, ((0, Bp - B), (0, 0)))
        c = jnp.pad(c, ((0, Bp - B), (0, 0)))
        eps_p = jnp.pad(eps_p, ((0, Bp - B), (0, 0)))

    Din = input_dim + c_dim

    def batch_spec(feat):
        return pl.BlockSpec((TB, feat), lambda i: (i, 0))

    def resident(shape):
        return pl.BlockSpec(shape, lambda i: (0, 0))

    muvar, loc = pl.pallas_call(
        cvae_kernel,
        out_shape=(
            jax.ShapeDtypeStruct((Bp, 2 * Lp), jnp.float32),   # packed [mu | logvar]
            jax.ShapeDtypeStruct((Bp, Dp), jnp.float32),       # x_recon loc (padded lanes)
        ),
        grid=(Bp // TB,),
        in_specs=[
            batch_spec(Din),                     # xc
            batch_spec(c_dim),                   # c
            batch_spec(Lp),                      # eps
            resident((Din, Hp)), resident((1, Hp)),          # encoder layer 1
            resident((Hp, 2 * Lp)), resident((1, 2 * Lp)),   # fused mu/logvar head
            resident((Lp, Hp)), resident((c_dim, Hp)), resident((1, Hp)),  # decoder layer 1
            resident((Hp, Dp)), resident((1, Dp)),           # decoder mean layer
        ],
        out_specs=(batch_spec(2 * Lp), batch_spec(Dp)),
        compiler_params=pltpu.CompilerParams(dimension_semantics=("parallel",)),
    )(xc, c, eps_p,
      packed["w_e1"], packed["b_e1"],
      packed["w_head"], packed["b_head"],
      packed["w_d1z"], packed["w_d1c"], packed["b_d1"],
      packed["w_dm"], packed["b_dm"])

    mu = muvar[:B, :latent]
    logvar = muvar[:B, Lp:Lp + latent]
    loc = loc[:B, :input_dim]
    # Parameter-only quantity -> computed outside the kernel.
    scale = jnp.exp(0.5 * params["logvar_out"])
    return {"x_recon_loc": loc, "x_recon_scale": scale, "mu": mu, "logvar": logvar}


# ----------------------------------------------------------------------------- reference
def cvae_forward_ref(x, c, eps, params, mxu_dtype=jnp.bfloat16):
    """Pure-JAX reference, using the same bf16-at-matmul / f32-elementwise recipe."""
    f32 = jnp.float32

    def mm(a, w):
        return jnp.dot(a.astype(mxu_dtype), w.astype(mxu_dtype),
                       preferred_element_type=f32)

    c = c.astype(f32)
    xc = jnp.concatenate([x.astype(f32), c], axis=1)
    h1 = mm(xc, params["w_e1"]) + params["b_e1"]
    mu = mm(h1, params["w_mu"]) + params["b_mu"]
    logvar = mm(h1, params["w_lv"]) + params["b_lv"]
    z = mu + eps * jnp.exp(0.5 * logvar)
    zc = jnp.concatenate([z, c], axis=1)
    h2 = mm(zc, params["w_d1"]) + params["b_d1"]
    loc = mm(h2, params["w_dm"]) + params["b_dm"]
    scale = jnp.exp(0.5 * params["logvar_out"])
    return {"x_recon_loc": loc, "x_recon_scale": scale, "mu": mu, "logvar": logvar}


# ----------------------------------------------------------------------------- main
if __name__ == "__main__":
    # Shapes consistent with cVAE(input_dim=16, hidden_dim=[32], latent_dim=8, c_dim=4), batch=8.
    B, input_dim, hidden, latent_dim, c_dim = 8, 16, 32, 8, 4

    key = jax.random.PRNGKey(0)
    k_x, k_c, k_eps, k_params = jax.random.split(key, 4)

    x = jax.random.normal(k_x, (B, input_dim), jnp.float32)
    # conditioning variable (torch LongTensor -> used as float in cat)
    c = jax.random.randint(k_c, (B, c_dim), 0, 2).astype(jnp.float32)
    # eps for reparameterisation (torch.randn_like(mu)), generated deterministically here
    eps = jax.random.normal(k_eps, (B, latent_dim), jnp.float32)

    params = make_cvae_params(k_params, input_dim, hidden, latent_dim, c_dim)
    packed = pack_cvae_params(params)

    out = cvae_forward(x, c, eps, params, packed=packed)
    jax.block_until_ready(out)

    ref = cvae_forward_ref(x, c, eps, params)
    for name in out:
        assert out[name].shape == ref[name].shape, (name, out[name].shape, ref[name].shape)
        assert jnp.allclose(out[name], ref[name], atol=1e-2, rtol=1e-2), name

    print("KERNEL_OK")
</pallas_src>

<mosaic_0001>
module attributes {stable_mosaic.version = 11 : i64} {
  func.func @cvae_kernel(%arg0: i32, %arg1: memref<8x20xf32, #tpu.memory_space<vmem>>, %arg2: memref<8x4xf32, #tpu.memory_space<vmem>>, %arg3: memref<8x128xf32, #tpu.memory_space<vmem>>, %arg4: memref<20x128xbf16, #tpu.memory_space<vmem>>, %arg5: memref<1x128xf32, #tpu.memory_space<vmem>>, %arg6: memref<128x256xbf16, #tpu.memory_space<vmem>>, %arg7: memref<1x256xf32, #tpu.memory_space<vmem>>, %arg8: memref<128x128xbf16, #tpu.memory_space<vmem>>, %arg9: memref<4x128xbf16, #tpu.memory_space<vmem>>, %arg10: memref<1x128xf32, #tpu.memory_space<vmem>>, %arg11: memref<128x128xbf16, #tpu.memory_space<vmem>>, %arg12: memref<1x128xf32, #tpu.memory_space<vmem>>, %arg13: memref<8x256xf32, #tpu.memory_space<vmem>>, %arg14: memref<8x128xf32, #tpu.memory_space<vmem>>) attributes {dimension_semantics = [#tpu.dimension_semantics<parallel>], iteration_bounds = array<i64: 1>, scalar_prefetch = 0 : i64, scratch_operands = 0 : i64, tpu.core_type = #tpu.core_type<tc>, window_params = [{transform_indices = @transform_0, window_bounds = array<i64: 8, 20>}, {transform_indices = @transform_1, window_bounds = array<i64: 8, 4>}, {transform_indices = @transform_2, window_bounds = array<i64: 8, 128>}, {pipeline_mode = #tpu.pipeline_mode<synchronous>, transform_indices = @transform_3, window_bounds = array<i64: 20, 128>}, {pipeline_mode = #tpu.pipeline_mode<synchronous>, transform_indices = @transform_4, window_bounds = array<i64: 1, 128>}, {pipeline_mode = #tpu.pipeline_mode<synchronous>, transform_indices = @transform_5, window_bounds = array<i64: 128, 256>}, {pipeline_mode = #tpu.pipeline_mode<synchronous>, transform_indices = @transform_6, window_bounds = array<i64: 1, 256>}, {pipeline_mode = #tpu.pipeline_mode<synchronous>, transform_indices = @transform_7, window_bounds = array<i64: 128, 128>}, {pipeline_mode = #tpu.pipeline_mode<synchronous>, transform_indices = @transform_8, window_bounds = array<i64: 4, 128>}, {pipeline_mode = #tpu.pipeline_mode<synchronous>, transform_indices = @transform_9, window_bounds = array<i64: 1, 128>}, {pipeline_mode = #tpu.pipeline_mode<synchronous>, transform_indices = @transform_10, window_bounds = array<i64: 128, 128>}, {pipeline_mode = #tpu.pipeline_mode<synchronous>, transform_indices = @transform_11, window_bounds = array<i64: 1, 128>}, {transform_indices = @transform_12, window_bounds = array<i64: 8, 256>}, {transform_indices = @transform_13, window_bounds = array<i64: 8, 128>}]} {
    %c0 = arith.constant 0 : index
    %c0_0 = arith.constant 0 : index
    %0 = vector.load %arg1[%c0, %c0_0] : memref<8x20xf32, #tpu.memory_space<vmem>>, vector<8x20xf32>
    %c0_1 = arith.constant 0 : index
    %c0_2 = arith.constant 0 : index
    %1 = vector.load %arg2[%c0_1, %c0_2] : memref<8x4xf32, #tpu.memory_space<vmem>>, vector<8x4xf32>
    %c0_3 = arith.constant 0 : index
    %c0_4 = arith.constant 0 : index
    %2 = vector.load %arg3[%c0_3, %c0_4] : memref<8x128xf32, #tpu.memory_space<vmem>>, vector<8x128xf32>
    %3 = arith.truncf %0 : vector<8x20xf32> to vector<8x20xbf16>
    %c0_5 = arith.constant 0 : index
    %c0_6 = arith.constant 0 : index
    %4 = vector.load %arg4[%c0_5, %c0_6] : memref<20x128xbf16, #tpu.memory_space<vmem>>, vector<20x128xbf16>
    %cst = arith.constant dense<0.000000e+00> : vector<8x128xf32>
    %5 = tpu.matmul %3, %4, %cst {dimension_numbers = #tpu.dot_dimension_numbers<[1], [0], [0], [1], [0, 0, 1, 1], [], []>} : vector<8x20xbf16>, vector<20x128xbf16>, vector<8x128xf32> -> vector<8x128xf32>
    %c0_7 = arith.constant 0 : index
    %c0_8 = arith.constant 0 : index
    %6 = vector.load %arg5[%c0_7, %c0_8] : memref<1x128xf32, #tpu.memory_space<vmem>>, vector<1x128xf32>
    %7 = vector.broadcast %6 : vector<1x128xf32> to vector<8x128xf32>
    %8 = arith.addf %5, %7 : vector<8x128xf32>
    %9 = arith.truncf %1 : vector<8x4xf32> to vector<8x4xbf16>
    %c0_9 = arith.constant 0 : index
    %c0_10 = arith.constant 0 : index
    %10 = vector.load %arg9[%c0_9, %c0_10] : memref<4x128xbf16, #tpu.memory_space<vmem>>, vector<4x128xbf16>
    %cst_11 = arith.constant dense<0.000000e+00> : vector<8x128xf32>
    %11 = tpu.matmul %9, %10, %cst_11 {dimension_numbers = #tpu.dot_dimension_numbers<[1], [0], [0], [1], [0, 0, 1, 1], [], []>} : vector<8x4xbf16>, vector<4x128xbf16>, vector<8x128xf32> -> vector<8x128xf32>
    %c0_12 = arith.constant 0 : index
    %c0_13 = arith.constant 0 : index
    %12 = vector.load %arg10[%c0_12, %c0_13] : memref<1x128xf32, #tpu.memory_space<vmem>>, vector<1x128xf32>
    %13 = vector.broadcast %12 : vector<1x128xf32> to vector<8x128xf32>
    %14 = arith.addf %11, %13 : vector<8x128xf32>
    %15 = arith.truncf %8 : vector<8x128xf32> to vector<8x128xbf16>
    %c0_14 = arith.constant 0 : index
    %c0_15 = arith.constant 0 : index
    %16 = vector.load %arg6[%c0_14, %c0_15] : memref<128x256xbf16, #tpu.memory_space<vmem>>, vector<128x256xbf16>
    %cst_16 = arith.constant dense<0.000000e+00> : vector<8x256xf32>
    %17 = tpu.matmul %15, %16, %cst_16 {dimension_numbers = #tpu.dot_dimension_numbers<[1], [0], [0], [1], [0, 0, 1, 1], [], []>} : vector<8x128xbf16>, vector<128x256xbf16>, vector<8x256xf32> -> vector<8x256xf32>
    %c0_17 = arith.constant 0 : index
    %c0_18 = arith.constant 0 : index
    %18 = vector.load %arg7[%c0_17, %c0_18] : memref<1x256xf32, #tpu.memory_space<vmem>>, vector<1x256xf32>
    %19 = vector.broadcast %18 : vector<1x256xf32> to vector<8x256xf32>
    %20 = arith.addf %17, %19 : vector<8x256xf32>
    %21 = vector.extract_strided_slice %20 {offsets = [0, 0], sizes = [8, 128], strides = [1, 1]} : vector<8x256xf32> to vector<8x128xf32>
    %22 = vector.extract_strided_slice %20 {offsets = [0, 128], sizes = [8, 128], strides = [1, 1]} : vector<8x256xf32> to vector<8x128xf32>
    %cst_19 = arith.constant 5.000000e-01 : f32
    %23 = vector.broadcast %cst_19 : f32 to vector<8x128xf32>
    %24 = arith.mulf %23, %22 : vector<8x128xf32>
    %25 = math.exp %24 : vector<8x128xf32>
    %26 = arith.mulf %2, %25 : vector<8x128xf32>
    %27 = arith.addf %21, %26 : vector<8x128xf32>
    %28 = arith.truncf %27 : vector<8x128xf32> to vector<8x128xbf16>
    %c0_20 = arith.constant 0 : index
    %c0_21 = arith.constant 0 : index
    %29 = vector.load %arg8[%c0_20, %c0_21] : memref<128x128xbf16, #tpu.memory_space<vmem>>, vector<128x128xbf16>
    %cst_22 = arith.constant dense<0.000000e+00> : vector<8x128xf32>
    %30 = tpu.matmul %28, %29, %cst_22 {dimension_numbers = #tpu.dot_dimension_numbers<[1], [0], [0], [1], [0, 0, 1, 1], [], []>} : vector<8x128xbf16>, vector<128x128xbf16>, vector<8x128xf32> -> vector<8x128xf32>
    %31 = arith.addf %30, %14 : vector<8x128xf32>
    %32 = arith.truncf %31 : vector<8x128xf32> to vector<8x128xbf16>
    %c0_23 = arith.constant 0 : index
    %c0_24 = arith.constant 0 : index
    %33 = vector.load %arg11[%c0_23, %c0_24] : memref<128x128xbf16, #tpu.memory_space<vmem>>, vector<128x128xbf16>
    %cst_25 = arith.constant dense<0.000000e+00> : vector<8x128xf32>
    %34 = tpu.matmul %32, %33, %cst_25 {dimension_numbers = #tpu.dot_dimension_numbers<[1], [0], [0], [1], [0, 0, 1, 1], [], []>} : vector<8x128xbf16>, vector<128x128xbf16>, vector<8x128xf32> -> vector<8x128xf32>
    %c0_26 = arith.constant 0 : index
    %c0_27 = arith.constant 0 : index
    %35 = vector.load %arg12[%c0_26, %c0_27] : memref<1x128xf32, #tpu.memory_space<vmem>>, vector<1x128xf32>
    %36 = vector.broadcast %35 : vector<1x128xf32> to vector<8x128xf32>
    %37 = arith.addf %34, %36 : vector<8x128xf32>
    %c0_28 = arith.constant 0 : index
    %c0_29 = arith.constant 0 : index
    %38 = vector.load %arg13[%c0_28, %c0_29] : memref<8x256xf32, #tpu.memory_space<vmem>>, vector<8x256xf32>
    tpu.vector_store %arg13[%c0_28, %c0_29], %20 {strides = array<i32>} : memref<8x256xf32, #tpu.memory_space<vmem>>, vector<8x256xf32>,
    %c0_30 = arith.constant 0 : index
    %c0_31 = arith.constant 0 : index
    %39 = vector.load %arg14[%c0_30, %c0_31] : memref<8x128xf32, #tpu.memory_space<vmem>>, vector<8x128xf32>
    tpu.vector_store %arg14[%c0_30, %c0_31], %37 {strides = array<i32>} : memref<8x128xf32, #tpu.memory_space<vmem>>, vector<8x128xf32>,
    return
  }
  func.func @transform_0(%arg0: i32) -> (i32, i32) {
    %c0_i32 = arith.constant 0 : i32
    %c0_i32_0 = arith.constant 0 : i32
    return %arg0, %c0_i32 : i32, i32
  }
  func.func @transform_1(%arg0: i32) -> (i32, i32) {
    %c0_i32 = arith.constant 0 : i32
    %c0_i32_0 = arith.constant 0 : i32
    return %arg0, %c0_i32 : i32, i32
  }
  func.func @transform_2(%arg0: i32) -> (i32, i32) {
    %c0_i32 = arith.constant 0 : i32
    %c0_i32_0 = arith.constant 0 : i32
    return %arg0, %c0_i32 : i32, i32
  }
  func.func @transform_3(%arg0: i32) -> (i32, i32) {
    %c0_i32 = arith.constant 0 : i32
    %c0_i32_0 = arith.constant 0 : i32
    %c0_i32_1 = arith.constant 0 : i32
    return %c0_i32, %c0_i32_0 : i32, i32
  }
  func.func @transform_4(%arg0: i32) -> (i32, i32) {
    %c0_i32 = arith.constant 0 : i32
    %c0_i32_0 = arith.constant 0 : i32
    %c0_i32_1 = arith.constant 0 : i32
    return %c0_i32, %c0_i32_0 : i32, i32
  }
  func.func @transform_5(%arg0: i32) -> (i32, i32) {
    %c0_i32 = arith.constant 0 : i32
    %c0_i32_0 = arith.constant 0 : i32
    %c0_i32_1 = arith.constant 0 : i32
    return %c0_i32, %c0_i32_0 : i32, i32
  }
  func.func @transform_6(%arg0: i32) -> (i32, i32) {
    %c0_i32 = arith.constant 0 : i32
    %c0_i32_0 = arith.constant 0 : i32
    %c0_i32_1 = arith.constant 0 : i32
    return %c0_i32, %c0_i32_0 : i32, i32
  }
  func.func @transform_7(%arg0: i32) -> (i32, i32) {
    %c0_i32 = arith.constant 0 : i32
    %c0_i32_0 = arith.constant 0 : i32
    %c0_i32_1 = arith.constant 0 : i32
    return %c0_i32, %c0_i32_0 : i32, i32
  }
  func.func @transform_8(%arg0: i32) -> (i32, i32) {
    %c0_i32 = arith.constant 0 : i32
    %c0_i32_0 = arith.constant 0 : i32
    %c0_i32_1 = arith.constant 0 : i32
    return %c0_i32, %c0_i32_0 : i32, i32
  }
  func.func @transform_9(%arg0: i32) -> (i32, i32) {
    %c0_i32 = arith.constant 0 : i32
    %c0_i32_0 = arith.constant 0 : i32
    %c0_i32_1 = arith.constant 0 : i32
    return %c0_i32, %c0_i32_0 : i32, i32
  }
  func.func @transform_10(%arg0: i32) -> (i32, i32) {
    %c0_i32 = arith.constant 0 : i32
    %c0_i32_0 = arith.constant 0 : i32
    %c0_i32_1 = arith.constant 0 : i32
    return %c0_i32, %c0_i32_0 : i32, i32
  }
  func.func @transform_11(%arg0: i32) -> (i32, i32) {
    %c0_i32 = arith.constant 0 : i32
    %c0_i32_0 = arith.constant 0 : i32
    %c0_i32_1 = arith.constant 0 : i32
    return %c0_i32, %c0_i32_0 : i32, i32
  }
  func.func @transform_12(%arg0: i32) -> (i32, i32) {
    %c0_i32 = arith.constant 0 : i32
    %c0_i32_0 = arith.constant 0 : i32
    return %arg0, %c0_i32 : i32, i32
  }
  func.func @transform_13(%arg0: i32) -> (i32, i32) {
    %c0_i32 = arith.constant 0 : i32
    %c0_i32_0 = arith.constant 0 : i32
    return %arg0, %c0_i32 : i32, i32
  }
}

</mosaic_0001>

<llo_original>
// kernel: tpu_custom_call.1
$region0: #{tpu_custom_call.1}
  #allocation0 [shape = 'u32[]', space=smem, size = 0x4, offset = 0x4, fixed_abs, tag = 'smem constant byte address 0x4 - core index']
  #allocation1 [shape = 'u32[72,128]{1,0:T(1,128)}', space=vmem, size = 0x9000, scoped, tag = 'internal scratch']
  %s0 = inlined_call_operand.hbm [shape: f32[8,20], index: 0, kind: input, shape index: {}]
  %s1 = inlined_call_operand.vmem [shape: f32[8,4], index: 1, kind: input, shape index: {}]
  %s2 = inlined_call_operand.hbm [shape: f32[8,128], index: 2, kind: input, shape index: {}]
  %s3 = inlined_call_operand.vmem [shape: bf16[20,128], index: 3, kind: input, shape index: {}]
  %s4 = inlined_call_operand.hbm [shape: f32[1,128], index: 4, kind: input, shape index: {}]
  %s5 = inlined_call_operand.hbm [shape: bf16[128,256], index: 5, kind: input, shape index: {}]
  %s6 = inlined_call_operand.vmem [shape: f32[1,256], index: 6, kind: input, shape index: {}]
  %s7 = inlined_call_operand.hbm [shape: bf16[128,128], index: 7, kind: input, shape index: {}]
  %s8 = inlined_call_operand.vmem [shape: bf16[4,128], index: 8, kind: input, shape index: {}]
  %s9 = inlined_call_operand.vmem [shape: f32[1,128], index: 9, kind: input, shape index: {}]
  %s10 = inlined_call_operand.hbm [shape: bf16[128,128], index: 10, kind: input, shape index: {}]
  %s11 = inlined_call_operand.vmem [shape: f32[1,128], index: 11, kind: input, shape index: {}]
  %s12 = inlined_call_operand.hbm [shape: f32[8,256], index: 12, kind: output, shape index: {0}]
  %s13 = inlined_call_operand.hbm [shape: f32[8,128], index: 13, kind: output, shape index: {1}]
  %14 = xla_tuple %s12, %s13
  %s15 = sld [smem:[#allocation0]]
  $region90: #{tpu_custom_call.1} parent=0
    _
  %s17 = ssub.s32 1, %s15
  %s18 = scalar_select 0, %s17, %s15
  $region1: #{tpu_custom_call.1} parent=0
    #allocation2 [shape = 'u8[4096]{0}', space=vmem, size = 0x1000, scoped, tag = 'input window, operand 0, single buffered']
    #allocation3 [shape = 's32[1]{0}', space=sflag, size = 0x4, scoped, tag = 'scoped memory for tpu_custom_call.1']
    #allocation4 [shape = 's32[1]{0}', space=sflag, size = 0x4, scoped, tag = 'scoped memory for tpu_custom_call.1']
    #allocation5 [shape = 'u8[4096]{0}', space=vmem, size = 0x1000, scoped, tag = 'input window, operand 2, single buffered']
    #allocation6 [shape = 's32[1]{0}', space=sflag, size = 0x4, scoped, tag = 'scoped memory for tpu_custom_call.1']
    #allocation7 [shape = 'u8[512]{0}', space=vmem, size = 0x400, scoped, tag = 'input window, operand 4, single buffered']
    #allocation8 [shape = 'u8[65536]{0}', space=vmem, size = 0x10000, scoped, tag = 'input window, operand 5, single buffered']
    #allocation9 [shape = 's32[1]{0}', space=sflag, size = 0x4, scoped, tag = 'scoped memory for tpu_custom_call.1']
    #allocation10 [shape = 'u8[32768]{0}', space=vmem, size = 0x8000, scoped, tag = 'input window, operand 7, single buffered']
    #allocation11 [shape = 'u8[32768]{0}', space=vmem, size = 0x8000, scoped, tag = 'input window, operand 10, single buffered']
    #allocation12 [shape = 's32[1]{0}', space=sflag, size = 0x4, scoped, tag = 'scoped memory for tpu_custom_call.1']
    #allocation13 [shape = 'u8[8192]{0}', space=vmem, size = 0x2000, scoped, tag = 'output window, operand 0, single buffered']
    #allocation14 [shape = 'u8[4096]{0}', space=vmem, size = 0x1000, scoped, tag = 'output window, operand 1, single buffered']
    #allocation15 [shape = 's32[1]{0}', space=sflag, size = 0x4, scoped, tag = 'scoped memory for tpu_custom_call.1']
    %19 = vsyncpa [#allocation3], 0
    %20 = vsyncpa [#allocation6], 0
    %21 = vsyncpa [#allocation9], 0
    %22 = vsyncpa [#allocation12], 0
    %23 = vsyncpa [#allocation4], 0
    %24 = vsyncpa [#allocation15], 0
    // Predicated region
    $region2: #{tpu_custom_call.1} parent=1 // pred_check
      _
    $region3: #{tpu_custom_call.1} parent=1 // pred_check_branch
      %26 = sbr.rel (0) target = $region5
    $region4: #{tpu_custom_call.1} parent=1 // pred_region
      %28 = vsyncadd [#allocation3], 0
      %s30 = sshll.u32 %s0, 4
      %s31 = int_to_ptr.hbm [resolvable:$true] %s30
      %s32 = sshll.u32 [#allocation2], 4
      %s33 = int_to_ptr.vmem [resolvable:$true] %s32
      %35 = dma.hbm_to_vmem [thread:$0]  %s31, 128, %s33, [#allocation3]
    $region5: #{tpu_custom_call.1} parent=1 // pred_fallthru
      _
    // Predicated region
    $region6: #{tpu_custom_call.1} parent=1 // pred_check
      _
    $region7: #{tpu_custom_call.1} parent=1 // pred_check_branch
      %37 = sbr.rel (0) target = $region9
    $region8: #{tpu_custom_call.1} parent=1 // pred_region
      _
    $region9: #{tpu_custom_call.1} parent=1 // pred_fallthru
      _
    // Predicated region
    $region10: #{tpu_custom_call.1} parent=1 // pred_check
      _
    $region11: #{tpu_custom_call.1} parent=1 // pred_check_branch
      %39 = sbr.rel (0) target = $region13
    $region12: #{tpu_custom_call.1} parent=1 // pred_region
      %41 = vsyncadd [#allocation6], 0
      %s43 = sshll.u32 %s2, 4
      %s44 = int_to_ptr.hbm [resolvable:$true] %s43
      %s45 = sshll.u32 [#allocation5], 4
      %s46 = int_to_ptr.vmem [resolvable:$true] %s45
      %48 = dma.hbm_to_vmem [thread:$0]  %s44, 128, %s46, [#allocation6]
    $region13: #{tpu_custom_call.1} parent=1 // pred_fallthru
      _
    // Predicated region
    $region14: #{tpu_custom_call.1} parent=1 // pred_check
      _
    $region15: #{tpu_custom_call.1} parent=1 // pred_check_branch
      %50 = sbr.rel (0) target = $region17
    $region16: #{tpu_custom_call.1} parent=1 // pred_region
      _
    $region17: #{tpu_custom_call.1} parent=1 // pred_fallthru
      _
    // Predicated region
    $region18: #{tpu_custom_call.1} parent=1 // pred_check
      _
    $region19: #{tpu_custom_call.1} parent=1 // pred_check_branch
      %52 = sbr.rel (0) target = $region21
    $region20: #{tpu_custom_call.1} parent=1 // pred_region
      %54 = vsyncadd [#allocation6], 0
      %s56 = sshll.u32 %s4, 4
      %s57 = int_to_ptr.hbm [resolvable:$true] %s56
      %s58 = sshll.u32 [#allocation7], 4
      %s59 = int_to_ptr.vmem [resolvable:$true] %s58
      %61 = dma.hbm_to_vmem [thread:$0]  %s57, 16, %s59, [#allocation6]
    $region21: #{tpu_custom_call.1} parent=1 // pred_fallthru
      _
    // Predicated region
    $region22: #{tpu_custom_call.1} parent=1 // pred_check
      _
    $region23: #{tpu_custom_call.1} parent=1 // pred_check_branch
      %63 = sbr.rel (0) target = $region25
    $region24: #{tpu_custom_call.1} parent=1 // pred_region
      %65 = vsyncadd [#allocation9], 0
      %s66 = sshll.u32 %s5, 4
      %s67 = int_to_ptr.hbm [resolvable:$true] %s66
      %s68 = sshll.u32 [#allocation8], 4
      %s69 = int_to_ptr.vmem [resolvable:$true] %s68
      %74 = dma.hbm_to_vmem [thread:$0]  %s67, 2048, %s69, [#allocation9], 128, 128, 8
    $region25: #{tpu_custom_call.1} parent=1 // pred_fallthru
      _
    // Predicated region
    $region26: #{tpu_custom_call.1} parent=1 // pred_check
      _
    $region27: #{tpu_custom_call.1} parent=1 // pred_check_branch
      %76 = sbr.rel (0) target = $region29
    $region28: #{tpu_custom_call.1} parent=1 // pred_region
      _
    $region29: #{tpu_custom_call.1} parent=1 // pred_fallthru
      _
    // Predicated region
    $region30: #{tpu_custom_call.1} parent=1 // pred_check
      _
    $region31: #{tpu_custom_call.1} parent=1 // pred_check_branch
      %78 = sbr.rel (0) target = $region33
    $region32: #{tpu_custom_call.1} parent=1 // pred_region
      %80 = vsyncadd [#allocation9], 0
      %s81 = sshll.u32 %s7, 4
      %s82 = int_to_ptr.hbm [resolvable:$true] %s81
      %s83 = sshll.u32 [#allocation10], 4
      %s84 = int_to_ptr.vmem [resolvable:$true] %s83
      %89 = dma.hbm_to_vmem [thread:$0]  %s82, 1024, %s84, [#allocation9], 64, 64, 4
    $region33: #{tpu_custom_call.1} parent=1 // pred_fallthru
      _
    // Predicated region
    $region34: #{tpu_custom_call.1} parent=1 // pred_check
      _
    $region35: #{tpu_custom_call.1} parent=1 // pred_check_branch
      %91 = sbr.rel (0) target = $region37
    $region36: #{tpu_custom_call.1} parent=1 // pred_region
      _
    $region37: #{tpu_custom_call.1} parent=1 // pred_fallthru
      _
    // Predicated region
    $region38: #{tpu_custom_call.1} parent=1 // pred_check
      _
    $region39: #{tpu_custom_call.1} parent=1 // pred_check_branch
      %93 = sbr.rel (0) target = $region41
    $region40: #{tpu_custom_call.1} parent=1 // pred_region
      _
    $region41: #{tpu_custom_call.1} parent=1 // pred_fallthru
      _
    // Predicated region
    $region42: #{tpu_custom_call.1} parent=1 // pred_check
      _
    $region43: #{tpu_custom_call.1} parent=1 // pred_check_branch
      %95 = sbr.rel (0) target = $region45
    $region44: #{tpu_custom_call.1} parent=1 // pred_region
      %97 = vsyncadd [#allocation12], 0
      %s98 = sshll.u32 %s10, 4
      %s99 = int_to_ptr.hbm [resolvable:$true] %s98
      %s100 = sshll.u32 [#allocation11], 4
      %s101 = int_to_ptr.vmem [resolvable:$true] %s100
      %106 = dma.hbm_to_vmem [thread:$0]  %s99, 1024, %s101, [#allocation12], 64, 64, 4
    $region45: #{tpu_custom_call.1} parent=1 // pred_fallthru
      _
    // Predicated region
    $region46: #{tpu_custom_call.1} parent=1 // pred_check
      _
    $region47: #{tpu_custom_call.1} parent=1 // pred_check_branch
      %108 = sbr.rel (0) target = $region49
    $region48: #{tpu_custom_call.1} parent=1 // pred_region
      _
    $region49: #{tpu_custom_call.1} parent=1 // pred_fallthru
      _
    // Predicated region
    $region50: #{tpu_custom_call.1} parent=1 // pred_check
      _
    $region51: #{tpu_custom_call.1} parent=1 // pred_check_branch
      %110 = sbr.rel (0) target = $region53
    $region52: #{tpu_custom_call.1} parent=1 // pred_region
      %112 = dma.done [#allocation3], 128
    $region53: #{tpu_custom_call.1} parent=1 // pred_fallthru
      _
    // Predicated region
    $region54: #{tpu_custom_call.1} parent=1 // pred_check
      _
    $region55: #{tpu_custom_call.1} parent=1 // pred_check_branch
      %114 = sbr.rel (0) target = $region57
    $region56: #{tpu_custom_call.1} parent=1 // pred_region
      %116 = dma.done [#allocation6], 128
    $region57: #{tpu_custom_call.1} parent=1 // pred_fallthru
      _
    // Predicated region
    $region58: #{tpu_custom_call.1} parent=1 // pred_check
      _
    $region59: #{tpu_custom_call.1} parent=1 // pred_check_branch
      %118 = sbr.rel (0) target = $region61
    $region60: #{tpu_custom_call.1} parent=1 // pred_region
      %120 = dma.done [#allocation6], 16
    $region61: #{tpu_custom_call.1} parent=1 // pred_fallthru
      _
    // Predicated region
    $region62: #{tpu_custom_call.1} parent=1 // pred_check
      _
    $region63: #{tpu_custom_call.1} parent=1 // pred_check_branch
      %122 = sbr.rel (0) target = $region65
    $region64: #{tpu_custom_call.1} parent=1 // pred_region
      %124 = dma.done [#allocation9], 2048
    $region65: #{tpu_custom_call.1} parent=1 // pred_fallthru
      _
    // Predicated region
    $region66: #{tpu_custom_call.1} parent=1 // pred_check
      _
    $region67: #{tpu_custom_call.1} parent=1 // pred_check_branch
      %126 = sbr.rel (0) target = $region69
    $region68: #{tpu_custom_call.1} parent=1 // pred_region
      %128 = dma.done [#allocation9], 1024
    $region69: #{tpu_custom_call.1} parent=1 // pred_fallthru
      _
    // Predicated region
    $region70: #{tpu_custom_call.1} parent=1 // pred_check
      _
    $region71: #{tpu_custom_call.1} parent=1 // pred_check_branch
      %130 = sbr.rel (0) target = $region73
    $region72: #{tpu_custom_call.1} parent=1 // pred_region
      %132 = dma.done [#allocation12], 1024
    $region73: #{tpu_custom_call.1} parent=1 // pred_fallthru
      _
    %v134 = vld [vmem:[#allocation2] sm:$0xff]
    %v135 = vld [vmem:[%s1] sm:$0xff]
    %v136 = vld [vmem:[#allocation5] sm:$0xff]
    %v137 = vpack.c.bf16 %v134, %v134
    %v138 = vld [vmem:[%s3] sm:$0xf]
    %v139 = vld [vmem:[%s3 + $0x4] sm:$0xf]
    %v140 = vld [vmem:[%s3 + $0x8] sm:$0x3]
    %v141 = vld [vmem:[#allocation7] sm:$0x1]
    %v143 = vperm.slane %v141, 0
    %v148 = vunpack.c.l.b16 %v138
    %v149 = vunpack.c.l.b16 %v139
    %v150 = vunpack.c.l.b16 %v140
    %v151 = vpack.c.b16 %v149, %v148
    %v152 = vpack.c.b16 %v150, %v150
    %vm154 = vcmask 162816
    %v156 = vsel %vm154, %v137, 0
    %vm158 = vcmask 1041408
    %v160 = vsel %vm158, %v152, 0
    %162 = vmatpush.bf16.msra.mxu0 0
    %163 = vmatpush.bf16.msra.mxu0 0
    %164 = vmatpush.bf16.msra.mxu0 0
    %165 = vmatpush.bf16.msra.mxu0 0
    %166 = vmatpush.bf16.msra.mxu0 0
    %167 = vmatpush.bf16.msra.mxu0 0
    %168 = vmatpush.bf16.msra.mxu0 %v160
    %169 = vmatpush.bf16.msra.mxu0 %v151
    %170 = vmatmul.bf16.gmra.mxu0 %v156
    %v171 = vpop.f32.mrf.mxu0
    %v172 = vadd.f32 %v143, %v171
    %v173 = vpop.f32.mrf.mxu0
    %174 = vdwg.mxu0
    %v175 = vpack.c.bf16 %v135, %v135
    %v176 = vld [vmem:[%s8] sm:$0x3]
    %v177 = vld [vmem:[%s9] sm:$0x1]
    %v179 = vperm.slane %v177, 0
    %vm181 = vcmask 31744
    %v183 = vsel %vm181, %v175, 0
    %v186 = vsel %vm158, %v176, 0
    %188 = vmatpush.bf16.msra.mxu0 0
    %189 = vmatpush.bf16.msra.mxu0 0
    %190 = vmatpush.bf16.msra.mxu0 0
    %191 = vmatpush.bf16.msra.mxu0 0
    %192 = vmatpush.bf16.msra.mxu0 0
    %193 = vmatpush.bf16.msra.mxu0 0
    %194 = vmatpush.bf16.msra.mxu0 0
    %195 = vmatpush.bf16.msra.mxu0 %v186
    %196 = vmatmul.bf16.gmra.mxu0 %v183
    %v197 = vpop.f32.mrf.mxu0
    %v198 = vadd.f32 %v179, %v197
    %v199 = vpop.f32.mrf.mxu0
    %200 = vdwg.mxu0
    %v201 = vpack.c.bf16 %v172, %v172
    %v202 = vld [vmem:[#allocation8] sm:$0xff]
    %v203 = vld [vmem:[#allocation8 + $0x8] sm:$0xff]
    %v204 = vld [vmem:[#allocation8 + $0x10] sm:$0xff]
    %v205 = vld [vmem:[#allocation8 + $0x18] sm:$0xff]
    %v206 = vld [vmem:[#allocation8 + $0x20] sm:$0xff]
    %v207 = vld [vmem:[#allocation8 + $0x28] sm:$0xff]
    %v208 = vld [vmem:[#allocation8 + $0x30] sm:$0xff]
    %v209 = vld [vmem:[#allocation8 + $0x38] sm:$0xff]
    %v210 = vld [vmem:[#allocation8 + $0x40] sm:$0xff]
    %v211 = vld [vmem:[#allocation8 + $0x48] sm:$0xff]
    %v212 = vld [vmem:[#allocation8 + $0x50] sm:$0xff]
    %v213 = vld [vmem:[#allocation8 + $0x58] sm:$0xff]
    %v214 = vld [vmem:[#allocation8 + $0x60] sm:$0xff]
    %v215 = vld [vmem:[#allocation8 + $0x68] sm:$0xff]
    %v216 = vld [vmem:[#allocation8 + $0x70] sm:$0xff]
    %v217 = vld [vmem:[#allocation8 + $0x78] sm:$0xff]
    %v218 = vld [vmem:[%s6] sm:$0x3]
    %v220 = vperm.slane %v218, 0
    %v221 = vperm.slane %v218, 1
    %v240 = vunpack.c.l.b16 %v202
    %v241 = vunpack.c.h.b16 %v202
    %v242 = vunpack.c.l.b16 %v203
    %v243 = vunpack.c.h.b16 %v203
    %v244 = vunpack.c.l.b16 %v204
    %v245 = vunpack.c.h.b16 %v204
    %v246 = vunpack.c.l.b16 %v205
    %v247 = vunpack.c.h.b16 %v205
    %v248 = vunpack.c.l.b16 %v206
    %v249 = vunpack.c.h.b16 %v206
    %v250 = vunpack.c.l.b16 %v207
    %v251 = vunpack.c.h.b16 %v207
    %v252 = vunpack.c.l.b16 %v208
    %v253 = vunpack.c.h.b16 %v208
    %v254 = vunpack.c.l.b16 %v209
    %v255 = vunpack.c.h.b16 %v209
    %v256 = vunpack.c.l.b16 %v210
    %v257 = vunpack.c.h.b16 %v210
    %v258 = vunpack.c.l.b16 %v211
    %v259 = vunpack.c.h.b16 %v211
    %v260 = vunpack.c.l.b16 %v212
    %v261 = vunpack.c.h.b16 %v212
    %v262 = vunpack.c.l.b16 %v213
    %v263 = vunpack.c.h.b16 %v213
    %v264 = vunpack.c.l.b16 %v214
    %v265 = vunpack.c.h.b16 %v214
    %v266 = vunpack.c.l.b16 %v215
    %v267 = vunpack.c.h.b16 %v215
    %v268 = vunpack.c.l.b16 %v216
    %v269 = vunpack.c.h.b16 %v216
    %v270 = vunpack.c.l.b16 %v217
    %v271 = vunpack.c.h.b16 %v217
    %v272 = vpack.c.b16 %v242, %v240
    %v273 = vpack.c.b16 %v243, %v241
    %v274 = vpack.c.b16 %v246, %v244
    %v275 = vpack.c.b16 %v247, %v245
    %v276 = vpack.c.b16 %v250, %v248
    %v277 = vpack.c.b16 %v251, %v249
    %v278 = vpack.c.b16 %v254, %v252
    %v279 = vpack.c.b16 %v255, %v253
    %v280 = vpack.c.b16 %v258, %v256
    %v281 = vpack.c.b16 %v259, %v257
    %v282 = vpack.c.b16 %v262, %v260
    %v283 = vpack.c.b16 %v263, %v261
    %v284 = vpack.c.b16 %v266, %v264
    %v285 = vpack.c.b16 %v267, %v265
    %v286 = vpack.c.b16 %v270, %v268
    %v287 = vpack.c.b16 %v271, %v269
    %304 = vmatpush.bf16.msra.mxu0 %v286
    %305 = vmatpush.bf16.msra.mxu0 %v284
    %306 = vmatpush.bf16.msra.mxu0 %v282
    %307 = vmatpush.bf16.msra.mxu0 %v280
    %308 = vmatpush.bf16.msra.mxu0 %v278
    %309 = vmatpush.bf16.msra.mxu0 %v276
    %310 = vmatpush.bf16.msra.mxu0 %v274
    %311 = vmatpush.bf16.msra.mxu0 %v272
    %312 = vmatmul.bf16.gmra.mxu0 %v201
    %v313 = vpop.f32.mrf.mxu0
    %v314 = vadd.f32 %v220, %v313
    %v315 = vpop.f32.mrf.mxu0
    %316 = vdwg.mxu0
    %317 = vmatpush.bf16.msra.mxu0 %v287
    %318 = vmatpush.bf16.msra.mxu0 %v285
    %319 = vmatpush.bf16.msra.mxu0 %v283
    %320 = vmatpush.bf16.msra.mxu0 %v281
    %321 = vmatpush.bf16.msra.mxu0 %v279
    %322 = vmatpush.bf16.msra.mxu0 %v277
    %323 = vmatpush.bf16.msra.mxu0 %v275
    %324 = vmatpush.bf16.msra.mxu0 %v273
    %325 = vmatmul.bf16.gmra.mxu0 %v201
    %v326 = vpop.f32.mrf.mxu0
    %v327 = vadd.f32 %v221, %v326
    %v328 = vpop.f32.mrf.mxu0
    %329 = vdwg.mxu0
    %v330 = vmul.f32 %v327, 0.5
    %v331 = vmul.f32 %v330, 1.442695
    %v332 = vpow.pop %v331
    %v333 = vmul.f32 %v136, %v332
    %v334 = vadd.f32 %v314, %v333
    %v335 = vpack.c.bf16 %v334, %v334
    %v336 = vld [vmem:[#allocation10] sm:$0xf]
    %v337 = vld [vmem:[#allocation10 + $0x4] sm:$0xf]
    %v338 = vld [vmem:[#allocation10 + $0x8] sm:$0xf]
    %v339 = vld [vmem:[#allocation10 + $0xc] sm:$0xf]
    %v340 = vld [vmem:[#allocation10 + $0x10] sm:$0xf]
    %v341 = vld [vmem:[#allocation10 + $0x14] sm:$0xf]
    %v342 = vld [vmem:[#allocation10 + $0x18] sm:$0xf]
    %v343 = vld [vmem:[#allocation10 + $0x1c] sm:$0xf]
    %v344 = vld [vmem:[#allocation10 + $0x20] sm:$0xf]
    %v345 = vld [vmem:[#allocation10 + $0x24] sm:$0xf]
    %v346 = vld [vmem:[#allocation10 + $0x28] sm:$0xf]
    %v347 = vld [vmem:[#allocation10 + $0x2c] sm:$0xf]
    %v348 = vld [vmem:[#allocation10 + $0x30] sm:$0xf]
    %v349 = vld [vmem:[#allocation10 + $0x34] sm:$0xf]
    %v350 = vld [vmem:[#allocation10 + $0x38] sm:$0xf]
    %v351 = vld [vmem:[#allocation10 + $0x3c] sm:$0xf]
    %v368 = vunpack.c.l.b16 %v336
    %v369 = vunpack.c.l.b16 %v337
    %v370 = vunpack.c.l.b16 %v338
    %v371 = vunpack.c.l.b16 %v339
    %v372 = vunpack.c.l.b16 %v340
    %v373 = vunpack.c.l.b16 %v341
    %v374 = vunpack.c.l.b16 %v342
    %v375 = vunpack.c.l.b16 %v343
    %v376 = vunpack.c.l.b16 %v344
    %v377 = vunpack.c.l.b16 %v345
    %v378 = vunpack.c.l.b16 %v346
    %v379 = vunpack.c.l.b16 %v347
    %v380 = vunpack.c.l.b16 %v348
    %v381 = vunpack.c.l.b16 %v349
    %v382 = vunpack.c.l.b16 %v350
    %v383 = vunpack.c.l.b16 %v351
    %v384 = vpack.c.b16 %v369, %v368
    %v385 = vpack.c.b16 %v371, %v370
    %v386 = vpack.c.b16 %v373, %v372
    %v387 = vpack.c.b16 %v375, %v374
    %v388 = vpack.c.b16 %v377, %v376
    %v389 = vpack.c.b16 %v379, %v378
    %v390 = vpack.c.b16 %v381, %v380
    %v391 = vpack.c.b16 %v383, %v382
    %400 = vmatpush.bf16.msra.mxu0 %v391
    %401 = vmatpush.bf16.msra.mxu0 %v390
    %402 = vmatpush.bf16.msra.mxu0 %v389
    %403 = vmatpush.bf16.msra.mxu0 %v388
    %404 = vmatpush.bf16.msra.mxu0 %v387
    %405 = vmatpush.bf16.msra.mxu0 %v386
    %406 = vmatpush.bf16.msra.mxu0 %v385
    %407 = vmatpush.bf16.msra.mxu0 %v384
    %408 = vmatmul.bf16.gmra.mxu0 %v335
    %v409 = vpop.f32.mrf.mxu0
    %v410 = vadd.f32 %v198, %v409
    %v411 = vpop.f32.mrf.mxu0
    %412 = vdwg.mxu0
    %v413 = vpack.c.bf16 %v410, %v410
    %v414 = vld [vmem:[#allocation11] sm:$0xf]
    %v415 = vld [vmem:[#allocation11 + $0x4] sm:$0xf]
    %v416 = vld [vmem:[#allocation11 + $0x8] sm:$0xf]
    %v417 = vld [vmem:[#allocation11 + $0xc] sm:$0xf]
    %v418 = vld [vmem:[#allocation11 + $0x10] sm:$0xf]
    %v419 = vld [vmem:[#allocation11 + $0x14] sm:$0xf]
    %v420 = vld [vmem:[#allocation11 + $0x18] sm:$0xf]
    %v421 = vld [vmem:[#allocation11 + $0x1c] sm:$0xf]
    %v422 = vld [vmem:[#allocation11 + $0x20] sm:$0xf]
    %v423 = vld [vmem:[#allocation11 + $0x24] sm:$0xf]
    %v424 = vld [vmem:[#allocation11 + $0x28] sm:$0xf]
    %v425 = vld [vmem:[#allocation11 + $0x2c] sm:$0xf]
    %v426 = vld [vmem:[#allocation11 + $0x30] sm:$0xf]
    %v427 = vld [vmem:[#allocation11 + $0x34] sm:$0xf]
    %v428 = vld [vmem:[#allocation11 + $0x38] sm:$0xf]
    %v429 = vld [vmem:[#allocation11 + $0x3c] sm:$0xf]
    %v430 = vld [vmem:[%s11] sm:$0x1]
    %v432 = vperm.slane %v430, 0
    %v450 = vunpack.c.l.b16 %v414
    %v451 = vunpack.c.l.b16 %v415
    %v452 = vunpack.c.l.b16 %v416
    %v453 = vunpack.c.l.b16 %v417
    %v454 = vunpack.c.l.b16 %v418
    %v455 = vunpack.c.l.b16 %v419
    %v456 = vunpack.c.l.b16 %v420
    %v457 = vunpack.c.l.b16 %v421
    %v458 = vunpack.c.l.b16 %v422
    %v459 = vunpack.c.l.b16 %v423
    %v460 = vunpack.c.l.b16 %v424
    %v461 = vunpack.c.l.b16 %v425
    %v462 = vunpack.c.l.b16 %v426
    %v463 = vunpack.c.l.b16 %v427
    %v464 = vunpack.c.l.b16 %v428
    %v465 = vunpack.c.l.b16 %v429
    %v466 = vpack.c.b16 %v451, %v450
    %v467 = vpack.c.b16 %v453, %v452
    %v468 = vpack.c.b16 %v455, %v454
    %v469 = vpack.c.b16 %v457, %v456
    %v470 = vpack.c.b16 %v459, %v458
    %v471 = vpack.c.b16 %v461, %v460
    %v472 = vpack.c.b16 %v463, %v462
    %v473 = vpack.c.b16 %v465, %v464
    %482 = vmatpush.bf16.msra.mxu0 %v473
    %483 = vmatpush.bf16.msra.mxu0 %v472
    %484 = vmatpush.bf16.msra.mxu0 %v471
    %485 = vmatpush.bf16.msra.mxu0 %v470
    %486 = vmatpush.bf16.msra.mxu0 %v469
    %487 = vmatpush.bf16.msra.mxu0 %v468
    %488 = vmatpush.bf16.msra.mxu0 %v467
    %489 = vmatpush.bf16.msra.mxu0 %v466
    %490 = vmatmul.bf16.gmra.mxu0 %v413
    %v491 = vpop.f32.mrf.mxu0
    %v492 = vadd.f32 %v432, %v491
    %v493 = vpop.f32.mrf.mxu0
    %494 = vdwg.mxu0
    %495 = vst [vmem:[#allocation13] sm:$0xff] %v314
    %496 = vst [vmem:[#allocation13 + $0x8] sm:$0xff] %v327
    %497 = vst [vmem:[#allocation14] sm:$0xff] %v492
    // Predicated region
    $region74: #{tpu_custom_call.1} parent=1 // pred_check
      _
    $region75: #{tpu_custom_call.1} parent=1 // pred_check_branch
      %499 = sbr.rel (0) target = $region77
    $region76: #{tpu_custom_call.1} parent=1 // pred_region
      %501 = vsyncadd [#allocation4], 0
      %s503 = sshll.u32 [#allocation13], 4
      %s504 = int_to_ptr.vmem [resolvable:$true] %s503
      %s505 = sshll.u32 %s12, 4
      %s506 = int_to_ptr.hbm [resolvable:$true] %s505
      %508 = dma.vmem_to_hbm [thread:$0]  %s504, 256, %s506, [#allocation4]
    $region77: #{tpu_custom_call.1} parent=1 // pred_fallthru
      _
    // Predicated region
    $region78: #{tpu_custom_call.1} parent=1 // pred_check
      _
    $region79: #{tpu_custom_call.1} parent=1 // pred_check_branch
      %510 = sbr.rel (0) target = $region81
    $region80: #{tpu_custom_call.1} parent=1 // pred_region
      %512 = vsyncadd [#allocation15], 0
      %s514 = sshll.u32 [#allocation14], 4
      %s515 = int_to_ptr.vmem [resolvable:$true] %s514
      %s516 = sshll.u32 %s13, 4
      %s517 = int_to_ptr.hbm [resolvable:$true] %s516
      %519 = dma.vmem_to_hbm [thread:$0]  %s515, 128, %s517, [#allocation15]
    $region81: #{tpu_custom_call.1} parent=1 // pred_fallthru
      _
    // Predicated region
    $region82: #{tpu_custom_call.1} parent=1 // pred_check
      _
    $region83: #{tpu_custom_call.1} parent=1 // pred_check_branch
      %521 = sbr.rel (0) target = $region85
    $region84: #{tpu_custom_call.1} parent=1 // pred_region
      %523 = dma.done [#allocation4], 256
    $region85: #{tpu_custom_call.1} parent=1 // pred_fallthru
      _
    // Predicated region
    $region86: #{tpu_custom_call.1} parent=1 // pred_check
      _
    $region87: #{tpu_custom_call.1} parent=1 // pred_check_branch
      %525 = sbr.rel (0) target = $region89
    $region88: #{tpu_custom_call.1} parent=1 // pred_region
      %527 = dma.done [#allocation15], 128
    $region89: #{tpu_custom_call.1} parent=1 // pred_fallthru
      _
    %528 = vsyncpa [#allocation3], 1
    %529 = vsyncpa [#allocation6], 1
    %530 = vsyncpa [#allocation9], 1
    %531 = vsyncpa [#allocation12], 1
    %532 = vsyncpa [#allocation4], 1
    %533 = vsyncpa [#allocation15], 1

</llo_original>
